<compile_context>
chip_gen: v6e
topology: v6e:2x2x1
jax: 0.10.0
libtpu: 0.0.40
codegen_flags: <defaults>
</compile_context>

<pallas_src>
import functools

import jax
import jax.numpy as jnp
from jax.experimental import pallas as pl
from jax.experimental.pallas import tpu as pltpu

_SQRT_HALF = 0.7071067811865476  # 1/sqrt(2) for exact (erf) GELU


# ----------------------------- tile helpers ---------------------------------

def _tile_rows(dim, preferred):
    """Tile for a second-to-last (sublane) axis: multiple of 8 or the full dim."""
    if dim <= preferred:
        return dim
    t = preferred - (preferred % 8)
    while t >= 8:
        if dim % t == 0:
            return t
        t -= 8
    return dim


def _tile_lanes(dim, preferred):
    """Tile for a last (lane) axis: multiple of 128 or the full dim."""
    if dim <= preferred:
        return dim
    t = preferred - (preferred % 128)
    while t >= 128:
        if dim % t == 0:
            return t
        t -= 128
    return dim


# ----------------------------- Pallas kernels -------------------------------

def _dense_kernel(x_ref, w_ref, b_ref, o_ref, acc_ref):
    k = pl.program_id(2)

    @pl.when(k == 0)
    def _():
        acc_ref[...] = jnp.zeros_like(acc_ref)

    acc_ref[...] += jnp.dot(
        x_ref[...].astype(jnp.bfloat16),
        w_ref[...].astype(jnp.bfloat16),
        preferred_element_type=jnp.float32,
    )

    @pl.when(k == pl.num_programs(2) - 1)
    def _():
        o_ref[...] = (acc_ref[...] + b_ref[...].astype(jnp.float32)).astype(o_ref.dtype)


def dense(x, w, b, *, tm=256, tn=256, tk=512):
    """Tiled x[M,K] @ w[K,N] + b[N] -> [M,N]; bf16 MXU feed, f32 accumulator."""
    M, K = x.shape
    K2, N = w.shape
    assert K == K2
    tm = _tile_rows(M, tm)
    tn = _tile_lanes(N, tn)
    tk = _tile_lanes(K, tk)
    grid = (M // tm, N // tn, K // tk)
    return pl.pallas_call(
        _dense_kernel,
        out_shape=jax.ShapeDtypeStruct((M, N), jnp.float32),
        grid_spec=pltpu.PrefetchScalarGridSpec(
            num_scalar_prefetch=0,
            grid=grid,
            in_specs=[
                pl.BlockSpec((tm, tk), lambda i, j, k: (i, k)),
                pl.BlockSpec((tk, tn), lambda i, j, k: (k, j)),
                pl.BlockSpec((1, tn), lambda i, j, k: (0, j)),
            ],
            out_specs=pl.BlockSpec((tm, tn), lambda i, j, k: (i, j)),
            scratch_shapes=[pltpu.VMEM((tm, tn), jnp.float32)],
        ),
        compiler_params=pltpu.CompilerParams(
            dimension_semantics=("parallel", "parallel", "arbitrary")),
    )(x, w, b.reshape(1, N))


def _dense_res_ln_kernel(x_ref, w_ref, b_ref, r_ref, g_ref, bb_ref, o_ref, acc_ref, *, eps):
    k = pl.program_id(1)

    @pl.when(k == 0)
    def _():
        acc_ref[...] = jnp.zeros_like(acc_ref)

    acc_ref[...] += jnp.dot(
        x_ref[...].astype(jnp.bfloat16),
        w_ref[...].astype(jnp.bfloat16),
        preferred_element_type=jnp.float32,
    )

    @pl.when(k == pl.num_programs(1) - 1)
    def _():
        y = acc_ref[...] + b_ref[...].astype(jnp.float32) + r_ref[...].astype(jnp.float32)
        mu = jnp.mean(y, axis=-1, keepdims=True)
        var = jnp.mean((y - mu) ** 2, axis=-1, keepdims=True)
        yn = (y - mu) * jax.lax.rsqrt(var + eps)
        o_ref[...] = (yn * g_ref[...].astype(jnp.float32)
                      + bb_ref[...].astype(jnp.float32)).astype(o_ref.dtype)


def dense_residual_ln(x, w, b, resid, gamma, beta, eps=1e-5, *, tm=256, tk=512):
    """LayerNorm(resid + x @ w + b): fused projection + residual + LN.  N is untiled
    (the LN reduction needs full rows); M and K are tiled/pipelined."""
    M, K = x.shape
    K2, N = w.shape
    assert K == K2 and resid.shape == (M, N)
    tm = _tile_rows(M, tm)
    tk = _tile_lanes(K, tk)
    grid = (M // tm, K // tk)
    kernel = functools.partial(_dense_res_ln_kernel, eps=eps)
    return pl.pallas_call(
        kernel,
        out_shape=jax.ShapeDtypeStruct((M, N), jnp.float32),
        grid_spec=pltpu.PrefetchScalarGridSpec(
            num_scalar_prefetch=0,
            grid=grid,
            in_specs=[
                pl.BlockSpec((tm, tk), lambda i, k: (i, k)),
                pl.BlockSpec((tk, N), lambda i, k: (k, 0)),
                pl.BlockSpec((1, N), lambda i, k: (0, 0)),
                pl.BlockSpec((tm, N), lambda i, k: (i, 0)),
                pl.BlockSpec((1, N), lambda i, k: (0, 0)),
                pl.BlockSpec((1, N), lambda i, k: (0, 0)),
            ],
            out_specs=pl.BlockSpec((tm, N), lambda i, k: (i, 0)),
            scratch_shapes=[pltpu.VMEM((tm, N), jnp.float32)],
        ),
        compiler_params=pltpu.CompilerParams(
            dimension_semantics=("parallel", "arbitrary")),
    )(x, w, b.reshape(1, N), resid, gamma.reshape(1, N), beta.reshape(1, N))


def _ffn_res_ln_kernel(x_ref, w1_ref, b1_ref, w2_ref, b2_ref, g_ref, bb_ref, o_ref, *, eps):
    x = x_ref[...].astype(jnp.float32)
    h = jnp.dot(x_ref[...].astype(jnp.bfloat16), w1_ref[...].astype(jnp.bfloat16),
                preferred_element_type=jnp.float32) + b1_ref[...].astype(jnp.float32)
    # exact (erf) GELU in f32, as used by HF BERT/RoBERTa
    h = 0.5 * h * (1.0 + jax.lax.erf(h * _SQRT_HALF))
    y = jnp.dot(h.astype(jnp.bfloat16), w2_ref[...].astype(jnp.bfloat16),
                preferred_element_type=jnp.float32) + b2_ref[...].astype(jnp.float32)
    y = y + x  # residual
    mu = jnp.mean(y, axis=-1, keepdims=True)
    var = jnp.mean((y - mu) ** 2, axis=-1, keepdims=True)
    yn = (y - mu) * jax.lax.rsqrt(var + eps)
    o_ref[...] = (yn * g_ref[...] + bb_ref[...]).astype(o_ref.dtype)


def ffn_residual_ln(x, w1, b1, w2, b2, gamma, beta, eps=1e-5, *, tm=128):
    """LayerNorm(x + GELU(x@w1+b1)@w2 + b2) fused in one kernel, VMEM intermediate.
    Tiled over rows; weights kept resident per block."""
    # TODO(synk): at roberta-large scale (H=1024, I=4096) also tile the H/I contraction axes.
    M, H = x.shape
    H2, I = w1.shape
    assert H == H2 and w2.shape == (I, H)
    tm = _tile_rows(M, tm)
    kernel = functools.partial(_ffn_res_ln_kernel, eps=eps)
    return pl.pallas_call(
        kernel,
        out_shape=jax.ShapeDtypeStruct((M, H), jnp.float32),
        grid=(M // tm,),
        in_specs=[
            pl.BlockSpec((tm, H), lambda i: (i, 0)),
            pl.BlockSpec((H, I), lambda i: (0, 0)),
            pl.BlockSpec((1, I), lambda i: (0, 0)),
            pl.BlockSpec((I, H), lambda i: (0, 0)),
            pl.BlockSpec((1, H), lambda i: (0, 0)),
            pl.BlockSpec((1, H), lambda i: (0, 0)),
            pl.BlockSpec((1, H), lambda i: (0, 0)),
        ],
        out_specs=pl.BlockSpec((tm, H), lambda i: (i, 0)),
        compiler_params=pltpu.CompilerParams(dimension_semantics=("parallel",)),
    )(x, w1, b1.reshape(1, I), w2, b2.reshape(1, H),
      gamma.reshape(1, H), beta.reshape(1, H))


def _layernorm_kernel(x_ref, g_ref, b_ref, o_ref, *, eps):
    x = x_ref[...].astype(jnp.float32)
    mu = jnp.mean(x, axis=-1, keepdims=True)
    var = jnp.mean((x - mu) ** 2, axis=-1, keepdims=True)
    o_ref[...] = ((x - mu) * jax.lax.rsqrt(var + eps) * g_ref[...] + b_ref[...]).astype(o_ref.dtype)


def layernorm(x, gamma, beta, eps=1e-5, *, tm=256):
    M, H = x.shape
    tm = _tile_rows(M, tm)
    kernel = functools.partial(_layernorm_kernel, eps=eps)
    return pl.pallas_call(
        kernel,
        out_shape=jax.ShapeDtypeStruct((M, H), jnp.float32),
        grid=(M // tm,),
        in_specs=[pl.BlockSpec((tm, H), lambda i: (i, 0)),
                  pl.BlockSpec((1, H), lambda i: (0, 0)),
                  pl.BlockSpec((1, H), lambda i: (0, 0))],
        out_specs=pl.BlockSpec((tm, H), lambda i: (i, 0)),
        compiler_params=pltpu.CompilerParams(dimension_semantics=("parallel",)),
    )(x, gamma.reshape(1, H), beta.reshape(1, H))


def _attention_kernel(qkv_ref, m_ref, ctx_ref, prob_ref, *, num_heads, head_dim, scale):
    qkv = qkv_ref[0].astype(jnp.float32)   # [S, 3H]  (fused q|k|v along the lane dim)
    bias = m_ref[0].astype(jnp.float32)    # [1, S]   additive mask
    H = num_heads * head_dim
    ctx_heads = []
    for h in range(num_heads):             # all heads of one batch element per grid step
        q = qkv[:, h * head_dim:(h + 1) * head_dim].astype(jnp.bfloat16)
        k = qkv[:, H + h * head_dim:H + (h + 1) * head_dim].astype(jnp.bfloat16)
        v = qkv[:, 2 * H + h * head_dim:2 * H + (h + 1) * head_dim].astype(jnp.bfloat16)
        # scores = q @ k^T  (contract head_dim of both operands; bf16 MXU, f32 acc)
        s = jax.lax.dot_general(q, k, (((1,), (1,)), ((), ())),
                                preferred_element_type=jnp.float32)
        s = s * scale + bias
        s = s - jnp.max(s, axis=-1, keepdims=True)
        e = jnp.exp(s)
        p = e * pl.reciprocal(jnp.sum(e, axis=-1, keepdims=True), approx=True)
        ctx_heads.append(jnp.dot(p.astype(jnp.bfloat16), v,
                                 preferred_element_type=jnp.float32))
        prob_ref[0, h] = p.astype(prob_ref.dtype)
    # single lane-dense [S, H] store (heads already laid out contiguously in hidden dim)
    ctx_ref[0] = jnp.concatenate(ctx_heads, axis=-1).astype(ctx_ref.dtype)


def attention(qkv, add_mask, num_heads, head_dim):
    """qkv: [B, S, 3H] fused projections; add_mask: [B, 1, S] additive (-1e9 on padding).
    Returns (context [B, S, H], probs [B, heads, S, S]); no XLA head transposes."""
    B, S, H3 = qkv.shape
    H = num_heads * head_dim
    assert H3 == 3 * H
    scale = 1.0 / float(head_dim) ** 0.5
    kernel = functools.partial(_attention_kernel, num_heads=num_heads,
                               head_dim=head_dim, scale=scale)
    return pl.pallas_call(
        kernel,
        out_shape=(jax.ShapeDtypeStruct((B, S, H), jnp.float32),
                   jax.ShapeDtypeStruct((B, num_heads, S, S), jnp.float32)),
        grid=(B,),
        in_specs=[pl.BlockSpec((1, S, H3), lambda b: (b, 0, 0)),
                  pl.BlockSpec((1, 1, S), lambda b: (b, 0, 0))],
        out_specs=(pl.BlockSpec((1, S, H), lambda b: (b, 0, 0)),
                   pl.BlockSpec((1, num_heads, S, S), lambda b: (b, 0, 0, 0))),
        compiler_params=pltpu.CompilerParams(dimension_semantics=("parallel",)),
    )(qkv, add_mask)


# --------------------------- Model (glue in JAX) -----------------------------

class Config:
    vocab_size = 100
    hidden = 32           # stands in for roberta-large's 1024
    num_layers = 2        # stands in for 24
    num_heads = 2
    head_dim = 16
    intermediate = 64
    max_pos = 64
    num_labels = 2
    cls_pad = 128         # lane-padded classifier output width
    ln_eps = 1e-5


def init_params(key, cfg):
    def nrm(k, shape, std=0.02):
        return std * jax.random.normal(k, shape, dtype=jnp.float32)

    keys = jax.random.split(key, 8 + cfg.num_layers)
    p = {
        "word_emb": nrm(keys[0], (cfg.vocab_size, cfg.hidden)),
        "pos_emb": nrm(keys[1], (cfg.max_pos, cfg.hidden)),
        "emb_ln_g": jnp.ones((cfg.hidden,), jnp.float32),
        "emb_ln_b": jnp.zeros((cfg.hidden,), jnp.float32),
        "cls_w": nrm(keys[2], (cfg.hidden, cfg.num_labels)),
        "cls_b": jnp.zeros((cfg.num_labels,), jnp.float32),
        "layers": [],
    }
    for li in range(cfg.num_layers):
        lk = jax.random.split(keys[8 + li], 4)
        H, I = cfg.hidden, cfg.intermediate
        p["layers"].append({
            # fused QKV projection: [H, 3H] / [3H]
            "wqkv": nrm(lk[0], (H, 3 * H)), "bqkv": jnp.zeros((3 * H,), jnp.float32),
            "wo": nrm(lk[1], (H, H)), "bo": jnp.zeros((H,), jnp.float32),
            "ln1_g": jnp.ones((H,), jnp.float32), "ln1_b": jnp.zeros((H,), jnp.float32),
            "w1": nrm(lk[2], (H, I)), "b1": jnp.zeros((I,), jnp.float32),
            "w2": nrm(lk[3], (I, H)), "b2": jnp.zeros((H,), jnp.float32),
            "ln2_g": jnp.ones((H,), jnp.float32), "ln2_b": jnp.zeros((H,), jnp.float32),
        })
    return p


def custom_bert_forward(params, input_ids, attention_mask, start_positions,
                        end_positions, cfg):
    B, S = input_ids.shape
    H, nh, dh = cfg.hidden, cfg.num_heads, cfg.head_dim
    M = B * S

    # ---- embeddings (lookup is glue; LayerNorm is a Pallas kernel) ----
    wemb = jnp.take(params["word_emb"], input_ids, axis=0)          # [B, S, H]
    pemb = params["pos_emb"][:S][None, :, :]                        # [1, S, H]
    emb = (wemb + pemb).reshape(M, H)
    hidden = layernorm(emb, params["emb_ln_g"], params["emb_ln_b"], cfg.ln_eps)

    # additive attention mask: [B, 1, S], 0 where attended, -1e9 where padding
    add_mask = ((1.0 - attention_mask.astype(jnp.float32)) * -1e9)[:, None, :]

    hidden_states = [hidden.reshape(B, S, H)]
    attentions = []

    for lp in params["layers"]:
        x = hidden                                                  # [M, H]
        # fused QKV projection: one tiled matmul producing [M, 3H]
        qkv = dense(x, lp["wqkv"], lp["bqkv"])
        # attention: splits q/k/v and heads inside the kernel (no XLA transposes)
        ctx, probs = attention(qkv.reshape(B, S, 3 * H), add_mask, nh, dh)
        attentions.append(probs)                                    # [B, nh, S, S]
        # attn-out projection + residual + LayerNorm fused
        x = dense_residual_ln(ctx.reshape(M, H), lp["wo"], lp["bo"], x,
                              lp["ln1_g"], lp["ln1_b"], cfg.ln_eps)
        # FFN (w1 + GELU + w2) + residual + LayerNorm fused
        hidden = ffn_residual_ln(x, lp["w1"], lp["b1"], lp["w2"], lp["b2"],
                                 lp["ln2_g"], lp["ln2_b"], cfg.ln_eps)
        hidden_states.append(hidden.reshape(B, S, H))

    # ---- classifier head: Linear(H -> 2), lane-padded to 128 for dense stores ----
    last_hidden_state = hidden_states[-1]                           # [B, S, H]
    cls_w_pad = jnp.zeros((H, cfg.cls_pad), jnp.float32).at[:, :cfg.num_labels].set(params["cls_w"])
    cls_b_pad = jnp.zeros((cfg.cls_pad,), jnp.float32).at[:cfg.num_labels].set(params["cls_b"])
    cls_out = dense(last_hidden_state.reshape(M, H), cls_w_pad, cls_b_pad)   # [M, 128]
    classifier_output = cls_out[:, :cfg.num_labels].reshape(B, S, cfg.num_labels)

    start_logits = classifier_output[:, :, 0]                       # [B, S]
    end_logits = classifier_output[:, :, 1]                         # [B, S]

    # start_positions / end_positions are accepted (as in the PyTorch forward)
    # but not used to compute the returned tensors.
    return {
        "start_logits": start_logits,
        "end_logits": end_logits,
        "hidden_states": tuple(hidden_states),
        "attentions": tuple(attentions),
    }


# --------------------------------- main --------------------------------------

if __name__ == "__main__":
    cfg = Config()
    B, S = 2, 8

    key = jax.random.PRNGKey(0)
    k_param, k_ids, k_sp, k_ep = jax.random.split(key, 4)

    params = init_params(k_param, cfg)

    input_ids = jax.random.randint(k_ids, (B, S), 0, cfg.vocab_size, dtype=jnp.int32)
    attention_mask = jnp.ones((B, S), dtype=jnp.int32).at[1, 6:].set(0)  # pad tail of 2nd example
    start_positions = jax.random.randint(k_sp, (B,), 0, S, dtype=jnp.int32)
    end_positions = jax.random.randint(k_ep, (B,), 0, S, dtype=jnp.int32)

    out = custom_bert_forward(params, input_ids, attention_mask,
                              start_positions, end_positions, cfg)
    jax.block_until_ready(out)

    assert out["start_logits"].shape == (B, S)
    assert out["end_logits"].shape == (B, S)
    assert len(out["hidden_states"]) == cfg.num_layers + 1
    assert len(out["attentions"]) == cfg.num_layers
    assert out["attentions"][0].shape == (B, cfg.num_heads, S, S)
    assert all(bool(jnp.all(jnp.isfinite(h))) for h in out["hidden_states"])

    print("KERNEL_OK")
</pallas_src>

<mosaic_0001>
module attributes {stable_mosaic.version = 11 : i64} {
  func.func @_layernorm_kernel(%arg0: i32, %arg1: memref<16x32xf32, #tpu.memory_space<vmem>>, %arg2: memref<1x32xf32, #tpu.memory_space<vmem>>, %arg3: memref<1x32xf32, #tpu.memory_space<vmem>>, %arg4: memref<16x32xf32, #tpu.memory_space<vmem>>) attributes {dimension_semantics = [#tpu.dimension_semantics<parallel>], iteration_bounds = array<i64: 1>, scalar_prefetch = 0 : i64, scratch_operands = 0 : i64, tpu.core_type = #tpu.core_type<tc>, window_params = [{transform_indices = @transform_0, window_bounds = array<i64: 16, 32>}, {pipeline_mode = #tpu.pipeline_mode<synchronous>, transform_indices = @transform_1, window_bounds = array<i64: 1, 32>}, {pipeline_mode = #tpu.pipeline_mode<synchronous>, transform_indices = @transform_2, window_bounds = array<i64: 1, 32>}, {transform_indices = @transform_3, window_bounds = array<i64: 16, 32>}]} {
    %c0 = arith.constant 0 : index
    %c0_0 = arith.constant 0 : index
    %0 = vector.load %arg1[%c0, %c0_0] : memref<16x32xf32, #tpu.memory_space<vmem>>, vector<16x32xf32>
    %cst = arith.constant dense<0.000000e+00> : vector<16xf32>
    %1 = vector.multi_reduction <add>, %0, %cst [1] : vector<16x32xf32> to vector<16xf32>
    %2 = vector.shape_cast %1 : vector<16xf32> to vector<16x1xf32>
    %cst_1 = arith.constant 3.200000e+01 : f32
    %3 = vector.broadcast %cst_1 : f32 to vector<16x1xf32>
    %4 = arith.divf %2, %3 : vector<16x1xf32>
    %5 = vector.broadcast %4 : vector<16x1xf32> to vector<16x32xf32>
    %6 = arith.subf %0, %5 : vector<16x32xf32>
    %7 = arith.mulf %6, %6 : vector<16x32xf32>
    %cst_2 = arith.constant dense<0.000000e+00> : vector<16xf32>
    %8 = vector.multi_reduction <add>, %7, %cst_2 [1] : vector<16x32xf32> to vector<16xf32>
    %9 = vector.shape_cast %8 : vector<16xf32> to vector<16x1xf32>
    %cst_3 = arith.constant 3.200000e+01 : f32
    %10 = vector.broadcast %cst_3 : f32 to vector<16x1xf32>
    %11 = arith.divf %9, %10 : vector<16x1xf32>
    %12 = vector.broadcast %4 : vector<16x1xf32> to vector<16x32xf32>
    %13 = arith.subf %0, %12 : vector<16x32xf32>
    %cst_4 = arith.constant 9.99999974E-6 : f32
    %14 = vector.broadcast %cst_4 : f32 to vector<16x1xf32>
    %15 = arith.addf %11, %14 : vector<16x1xf32>
    %16 = math.rsqrt %15 : vector<16x1xf32>
    %17 = vector.broadcast %16 : vector<16x1xf32> to vector<16x32xf32>
    %18 = arith.mulf %13, %17 : vector<16x32xf32>
    %c0_5 = arith.constant 0 : index
    %c0_6 = arith.constant 0 : index
    %19 = vector.load %arg2[%c0_5, %c0_6] : memref<1x32xf32, #tpu.memory_space<vmem>>, vector<1x32xf32>
    %20 = vector.broadcast %19 : vector<1x32xf32> to vector<16x32xf32>
    %21 = arith.mulf %18, %20 : vector<16x32xf32>
    %c0_7 = arith.constant 0 : index
    %c0_8 = arith.constant 0 : index
    %22 = vector.load %arg3[%c0_7, %c0_8] : memref<1x32xf32, #tpu.memory_space<vmem>>, vector<1x32xf32>
    %23 = vector.broadcast %22 : vector<1x32xf32> to vector<16x32xf32>
    %24 = arith.addf %21, %23 : vector<16x32xf32>
    %c0_9 = arith.constant 0 : index
    %c0_10 = arith.constant 0 : index
    %25 = vector.load %arg4[%c0_9, %c0_10] : memref<16x32xf32, #tpu.memory_space<vmem>>, vector<16x32xf32>
    tpu.vector_store %arg4[%c0_9, %c0_10], %24 {strides = array<i32>} : memref<16x32xf32, #tpu.memory_space<vmem>>, vector<16x32xf32>,
    return
  }
  func.func @transform_0(%arg0: i32) -> (i32, i32) {
    %c0_i32 = arith.constant 0 : i32
    %c0_i32_0 = arith.constant 0 : i32
    return %arg0, %c0_i32 : i32, i32
  }
  func.func @transform_1(%arg0: i32) -> (i32, i32) {
    %c0_i32 = arith.constant 0 : i32
    %c0_i32_0 = arith.constant 0 : i32
    %c0_i32_1 = arith.constant 0 : i32
    return %c0_i32, %c0_i32_0 : i32, i32
  }
  func.func @transform_2(%arg0: i32) -> (i32, i32) {
    %c0_i32 = arith.constant 0 : i32
    %c0_i32_0 = arith.constant 0 : i32
    %c0_i32_1 = arith.constant 0 : i32
    return %c0_i32, %c0_i32_0 : i32, i32
  }
  func.func @transform_3(%arg0: i32) -> (i32, i32) {
    %c0_i32 = arith.constant 0 : i32
    %c0_i32_0 = arith.constant 0 : i32
    return %arg0, %c0_i32 : i32, i32
  }
}

</mosaic_0001>

<llo_original>
// kernel: tpu_custom_call.1
$region0: #{tpu_custom_call.1}
  #allocation0 [shape = 'u32[]', space=smem, size = 0x4, offset = 0x4, fixed_abs, tag = 'smem constant byte address 0x4 - core index']
  #allocation1 [shape = 'u32[144,128]{1,0:T(1,128)}', space=vmem, size = 0x12000, scoped, tag = 'internal scratch']
  %s0 = inlined_call_operand.hbm [shape: f32[16,32], index: 0, kind: input, shape index: {}]
  %s1 = inlined_call_operand.vmem [shape: f32[1,32], index: 1, kind: input, shape index: {}]
  %s2 = inlined_call_operand.vmem [shape: f32[1,32], index: 2, kind: input, shape index: {}]
  %s3 = inlined_call_operand.hbm [shape: f32[16,32], index: 3, kind: output, shape index: {}]
  %s4 = sld [smem:[#allocation0]]
  $region26: #{tpu_custom_call.1} parent=0
    _
  %s6 = ssub.s32 1, %s4
  %s7 = scalar_select 0, %s6, %s4
  $region1: #{tpu_custom_call.1} parent=0
    #allocation2 [shape = 'u8[8192]{0}', space=vmem, size = 0x2000, scoped, tag = 'input window, operand 0, single buffered']
    #allocation3 [shape = 's32[1]{0}', space=sflag, size = 0x4, scoped, tag = 'scoped memory for tpu_custom_call.1']
    #allocation4 [shape = 's32[1]{0}', space=sflag, size = 0x4, scoped, tag = 'scoped memory for tpu_custom_call.1']
    #allocation5 [shape = 'u8[8192]{0}', space=vmem, size = 0x2000, scoped, tag = 'output window, operand 0, single buffered']
    %8 = vsyncpa [#allocation3], 0
    %9 = vsyncpa [#allocation4], 0
    // Predicated region
    $region2: #{tpu_custom_call.1} parent=1 // pred_check
      _
    $region3: #{tpu_custom_call.1} parent=1 // pred_check_branch
      %11 = sbr.rel (0) target = $region5
    $region4: #{tpu_custom_call.1} parent=1 // pred_region
      %s13 = ssub.s32 256, 256
      %14 = vsyncadd [#allocation3], %s13
      %s15 = sshll.u32 [#allocation2], 4
      %s16 = int_to_ptr.vmem [resolvable:$true] %s15
      %21 = dma.hbm_to_vmem [thread:$0]  %s0, 256, %s16, [#allocation3], 128, 128, 8
    $region5: #{tpu_custom_call.1} parent=1 // pred_fallthru
      _
    // Predicated region
    $region6: #{tpu_custom_call.1} parent=1 // pred_check
      _
    $region7: #{tpu_custom_call.1} parent=1 // pred_check_branch
      %23 = sbr.rel (0) target = $region9
    $region8: #{tpu_custom_call.1} parent=1 // pred_region
      _
    $region9: #{tpu_custom_call.1} parent=1 // pred_fallthru
      _
    // Predicated region
    $region10: #{tpu_custom_call.1} parent=1 // pred_check
      _
    $region11: #{tpu_custom_call.1} parent=1 // pred_check_branch
      %25 = sbr.rel (0) target = $region13
    $region12: #{tpu_custom_call.1} parent=1 // pred_region
      _
    $region13: #{tpu_custom_call.1} parent=1 // pred_fallthru
      _
    // Predicated region
    $region14: #{tpu_custom_call.1} parent=1 // pred_check
      _
    $region15: #{tpu_custom_call.1} parent=1 // pred_check_branch
      %27 = sbr.rel (0) target = $region17
    $region16: #{tpu_custom_call.1} parent=1 // pred_region
      %28 = dma.done [#allocation3], 256
    $region17: #{tpu_custom_call.1} parent=1 // pred_fallthru
      _
    %v29 = vld [vmem:[#allocation2] sm:$0xff]
    %v30 = vld [vmem:[#allocation2 + $0x8] sm:$0xff]
    %vm31 = vcmask 261120
    %v32 = vsel %vm31, %v29, 0.0
    %33 = vadd.xlane.f32.xlu0 %v32
    %v34 = vpop.xlane.xlu0 %33
    %v35 = vsel %vm31, %v30, 0.0
    %36 = vadd.xlane.f32.xlu0 %v35
    %v37 = vpop.xlane.xlu0 %36
    %v38 = vrcp.pop 32.0
    %v39 = vmul.f32 %v34, %v38
    %v40 = vmul.f32 %v37, %v38
    %v41 = vsub.f32 %v29, %v39
    %v42 = vsub.f32 %v30, %v40
    %v43 = vmul.f32 %v41, %v41
    %v44 = vmul.f32 %v42, %v42
    %v45 = vsel %vm31, %v43, 0.0
    %46 = vadd.xlane.f32.xlu0 %v45
    %v47 = vpop.xlane.xlu0 %46
    %v48 = vsel %vm31, %v44, 0.0
    %49 = vadd.xlane.f32.xlu0 %v48
    %v50 = vpop.xlane.xlu0 %49
    %v51 = vmul.f32 %v47, %v38
    %v52 = vmul.f32 %v50, %v38
    %v53 = vadd.f32 %v51, 1e-05
    %v54 = vadd.f32 %v52, 1e-05
    %v55 = vrsqrt.pop %v53
    %v56 = vrsqrt.pop %v54
    %v57 = vmul.f32 %v41, %v55
    %v58 = vmul.f32 %v42, %v56
    %v59 = vld [vmem:[%s1] sm:$0x1]
    %v61 = vlaneseq
    %v62 = vshrl.u32 %v61, 7
    %v63 = vsub.s32 0, %v62
    %v64 = vrot.slane %v59, %v63
    %v66 = vmul.f32 %v57, %v64
    %v67 = vmul.f32 %v58, %v64
    %v68 = vld [vmem:[%s2] sm:$0x1]
    %v70 = vlaneseq
    %v71 = vshrl.u32 %v70, 7
    %v72 = vsub.s32 0, %v71
    %v73 = vrot.slane %v68, %v72
    %v75 = vadd.f32 %v66, %v73
    %v76 = vadd.f32 %v67, %v73
    %77 = vst.msk [vmem:[#allocation5] sm:$0xff] %vm31, %v75
    %78 = vst.msk [vmem:[#allocation5 + $0x8] sm:$0xff] %vm31, %v76
    // Predicated region
    $region18: #{tpu_custom_call.1} parent=1 // pred_check
      _
    $region19: #{tpu_custom_call.1} parent=1 // pred_check_branch
      %80 = sbr.rel (0) target = $region21
    $region20: #{tpu_custom_call.1} parent=1 // pred_region
      %s82 = ssub.s32 256, 256
      %83 = vsyncadd [#allocation4], %s82
      %s84 = sshll.u32 [#allocation5], 4
      %s85 = int_to_ptr.vmem [resolvable:$true] %s84
      %90 = dma.vmem_to_hbm [thread:$0]  %s85, 256, %s3, [#allocation4], 128, 128, 8
    $region21: #{tpu_custom_call.1} parent=1 // pred_fallthru
      _
    // Predicated region
    $region22: #{tpu_custom_call.1} parent=1 // pred_check
      _
    $region23: #{tpu_custom_call.1} parent=1 // pred_check_branch
      %92 = sbr.rel (0) target = $region25
    $region24: #{tpu_custom_call.1} parent=1 // pred_region
      %93 = dma.done [#allocation4], 256
    $region25: #{tpu_custom_call.1} parent=1 // pred_fallthru
      _
    %94 = vsyncpa [#allocation3], 1
    %95 = vsyncpa [#allocation4], 1

</llo_original>
